<compile_context>
chip_gen: v7x
topology: tpu7x:2x2x1
jax: 0.10.0
libtpu: 0.0.40
codegen_flags: <defaults>
</compile_context>

<pallas_src>
import functools
import math

import jax
import jax.numpy as jnp
from jax.experimental import pallas as pl
from jax.experimental.pallas import tpu as pltpu

_LANE = 128
_MAX_TILE_ROWS = 8192                    # 8192 x 128 x 4B = 4 MiB per f32 tile
_VMEM_LIMIT_BYTES = 48 * 1024 * 1024     # headroom below v7x 64 MiB physical
_NCORES = 2                              # v7x TensorCores per chip


def _round_up(x, m):
    return ((x + m - 1) // m) * m


def _td_loss(r, v, nv, gamma, error_type):
    td = r + gamma * nv - v
    if error_type == "squared":
        return td * td
    return jnp.abs(td)


def _td_none_kernel(r_ref, v_ref, nv_ref, o_ref, *, gamma, error_type):
    r = r_ref[...].astype(jnp.float32)
    v = v_ref[...].astype(jnp.float32)
    nv = nv_ref[...].astype(jnp.float32)
    o_ref[...] = _td_loss(r, v, nv, gamma, error_type).astype(o_ref.dtype)


def _td_reduce_kernel(r_ref, v_ref, nv_ref, o_ref, acc_ref, *,
                      gamma, error_type, tile_rows, num_rows,
                      total_blocks, blocks_per_core, ragged, has_phantom):
    i = pl.program_id(1)
    blk = pl.program_id(0) * blocks_per_core + i   # logical block id

    @pl.when(i == 0)
    def _init():
        acc_ref[...] = jnp.zeros_like(acc_ref)

    def _accumulate(mask_tail):
        r = r_ref[...].astype(jnp.float32)
        v = v_ref[...].astype(jnp.float32)
        nv = nv_ref[...].astype(jnp.float32)
        loss = _td_loss(r, v, nv, gamma, error_type)
        if mask_tail:
            row = (jax.lax.broadcasted_iota(jnp.int32, loss.shape, 0)
                   + blk * tile_rows)
            loss = jnp.where(row < num_rows, loss, 0.0)
        # Lane-parallel partial sums: pure VALU adds, no per-tile XLU work.
        acc_ref[...] += loss.reshape(-1, 8, _LANE).sum(axis=0)

    if ragged:
        # Only the last logical block needs the row mask.
        @pl.when(blk < total_blocks - 1)
        def _body():
            _accumulate(False)

        @pl.when(blk == total_blocks - 1)
        def _tail():
            _accumulate(True)
    elif has_phantom:
        @pl.when(blk < total_blocks)
        def _body():
            _accumulate(False)
    else:
        _accumulate(False)

    @pl.when(i == pl.num_programs(1) - 1)
    def _finalize():
        o_ref[...] = acc_ref[...]


class TDErrorLossPallas:
    """Pallas TPU implementation of TDErrorLoss."""

    def __init__(self, discount_factor, reduction="none", error_type="squared",
                 max_tile_rows=_MAX_TILE_ROWS):
        if error_type not in ("squared", "abs"):
            raise ValueError(
                "Invalid error_type. Expected 'squared' or 'abs', got {}".format(error_type))
        if reduction not in ("none", "mean", "sum"):
            raise ValueError(
                "Invalid reduction. Expected 'none', 'mean', or 'sum', got {}".format(reduction))
        if max_tile_rows < 8 or max_tile_rows % 8 != 0:
            raise ValueError("max_tile_rows must be a positive multiple of 8.")
        self.discount_factor = float(discount_factor)
        self.reduction = reduction
        self.error_type = error_type
        self._max_tile_rows = int(max_tile_rows)

    def __call__(self, rewards, values, dones, next_values=None):
        if next_values is None:
            raise ValueError("next_values is required (matches td_error call path).")
        if rewards.shape != values.shape or rewards.shape != dones.shape \
                or rewards.shape != next_values.shape:
            raise ValueError("The shape of rewards, values, and dones must match.")
        # NOTE: `dones` is intentionally not passed to the kernel (unused in the
        # PyTorch forward's numerics) -> saves ~25% of HBM traffic.

        orig_shape = rewards.shape
        n = int(math.prod(orig_shape)) if len(orig_shape) > 0 else 1

        compute_dtype = jnp.result_type(rewards, values, next_values)
        itemsize = jnp.dtype(compute_dtype).itemsize

        def flat(x):
            return jnp.asarray(x, compute_dtype).reshape(-1)

        r, v, nv = flat(rewards), flat(values), flat(next_values)

        # Lane-dense layout: (num_rows, 128).
        num_rows = max(pl.cdiv(n, _LANE), 1)
        padded = num_rows * _LANE
        if padded != n:
            # Only triggers for non-128-aligned sizes (see TODO at top of file).
            pad = (0, padded - n)
            r = jnp.pad(r, pad)
            v = jnp.pad(v, pad)
            nv = jnp.pad(nv, pad)
        r = r.reshape(num_rows, _LANE)
        v = v.reshape(num_rows, _LANE)
        nv = nv.reshape(num_rows, _LANE)

        if self.reduction == "none":
            # Full-array block when it fits, otherwise 8-aligned tiles; the ragged
            # last block is handled by Pallas (OOB output writes are dropped).
            tile_rows = num_rows if num_rows <= self._max_tile_rows else self._max_tile_rows
            grid = (pl.cdiv(num_rows, tile_rows),)
            blk = pl.BlockSpec((tile_rows, _LANE), lambda i: (i, 0))
            kernel = functools.partial(
                _td_none_kernel,
                gamma=self.discount_factor,
                error_type=self.error_type,
            )
            out = pl.pallas_call(
                kernel,
                out_shape=jax.ShapeDtypeStruct((num_rows, _LANE), compute_dtype),
                grid=grid,
                in_specs=[blk, blk, blk],
                out_specs=blk,
                compiler_params=pltpu.CompilerParams(
                    dimension_semantics=("parallel",),
                    vmem_limit_bytes=_VMEM_LIMIT_BYTES),
                cost_estimate=pl.CostEstimate(
                    flops=4 * n, transcendentals=0,
                    bytes_accessed=4 * n * itemsize),
            )(r, v, nv)
            return out.reshape(-1)[:n].reshape(orig_shape)

        # -------- 'mean' / 'sum': streamed reduction, split across TCs --------
        min_blocks = pl.cdiv(num_rows, self._max_tile_rows)
        tile_rows = _round_up(pl.cdiv(num_rows, min_blocks), 8)
        total_blocks = pl.cdiv(num_rows, tile_rows)
        ragged = (total_blocks * tile_rows) != num_rows
        ncores = _NCORES if total_blocks >= 2 else 1
        bpc = pl.cdiv(total_blocks, ncores)          # blocks per core
        has_phantom = (ncores * bpc) != total_blocks

        def in_map(c, i, _bpc=bpc, _last=total_blocks - 1):
            # Clamp phantom steps onto the last real block (no OOB DMA); their
            # contribution is skipped inside the kernel via pl.when.
            return (jnp.minimum(c * _bpc + i, _last), 0)

        blk = pl.BlockSpec((tile_rows, _LANE), in_map)

        kernel = functools.partial(
            _td_reduce_kernel,
            gamma=self.discount_factor,
            error_type=self.error_type,
            tile_rows=tile_rows,
            num_rows=num_rows,
            total_blocks=total_blocks,
            blocks_per_core=bpc,
            ragged=ragged,
            has_phantom=has_phantom,
        )

        partials = pl.pallas_call(
            kernel,
            out_shape=jax.ShapeDtypeStruct((ncores, 8, _LANE), jnp.float32),
            grid=(ncores, bpc),
            in_specs=[blk, blk, blk],
            out_specs=pl.BlockSpec((None, 8, _LANE), lambda c, i: (c, 0, 0)),
            scratch_shapes=[pltpu.VMEM((8, _LANE), jnp.float32)],
            compiler_params=pltpu.CompilerParams(
                dimension_semantics=("parallel", "arbitrary"),
                vmem_limit_bytes=_VMEM_LIMIT_BYTES),
            cost_estimate=pl.CostEstimate(
                flops=5 * n, transcendentals=0,
                bytes_accessed=3 * n * itemsize + ncores * 8 * _LANE * 4),
        )(r, v, nv)

        total = jnp.sum(partials, dtype=jnp.float32)
        if self.reduction == "mean":
            total = total / float(n)
        return total.astype(compute_dtype)


def _reference(rewards, values, dones, next_values, gamma, reduction, error_type):
    returns = rewards + gamma * next_values
    td = returns - values
    loss = td ** 2 if error_type == "squared" else jnp.abs(td)
    if reduction == "none":
        return loss
    if reduction == "mean":
        return jnp.mean(loss)
    return jnp.sum(loss)


if __name__ == "__main__":
    key = jax.random.PRNGKey(0)
    gamma = 0.99
    ok = True

    # (shape, max_tile_rows) configs:
    #   (2, 8)   : tiny RL batch, single full-array block.
    #   (3, 37)  : non-128-aligned numel -> pad + ragged-tail mask in reduce path.
    #   (40, 64) : with max_tile_rows=8 forces multi-block / dual-core split /
    #              ragged last block / phantom grid step.
    configs = [((2, 8), _MAX_TILE_ROWS), ((3, 37), _MAX_TILE_ROWS), ((40, 64), 8)]

    for shape, mtr in configs:
        k1, k2, k3, k4, key = jax.random.split(key, 5)
        rewards = jax.random.normal(k1, shape, dtype=jnp.float32)
        values = jax.random.normal(k2, shape, dtype=jnp.float32)
        next_values = jax.random.normal(k3, shape, dtype=jnp.float32)
        dones = (jax.random.uniform(k4, shape) > 0.8).astype(jnp.float32)

        for reduction in ("none", "mean", "sum"):
            for error_type in ("squared", "abs"):
                mod = TDErrorLossPallas(gamma, reduction=reduction,
                                        error_type=error_type, max_tile_rows=mtr)
                out = mod(rewards, values, dones, next_values=next_values)
                out = jax.block_until_ready(out)
                ref = _reference(rewards, values, dones, next_values, gamma,
                                 reduction, error_type)
                if not jnp.allclose(out, ref, atol=1e-4, rtol=1e-4):
                    ok = False
                    print(f"MISMATCH shape={shape} max_tile_rows={mtr} "
                          f"reduction={reduction} error_type={error_type}")

    if ok:
        print("KERNEL_OK")
</pallas_src>

<mosaic_0001>
module attributes {stable_mosaic.version = 11 : i64} {
  func.func @_td_none_kernel(%arg0: i32, %arg1: memref<1x128xf32, #tpu.memory_space<vmem>>, %arg2: memref<1x128xf32, #tpu.memory_space<vmem>>, %arg3: memref<1x128xf32, #tpu.memory_space<vmem>>, %arg4: memref<1x128xf32, #tpu.memory_space<vmem>>) attributes {dimension_semantics = [#tpu.dimension_semantics<parallel>], iteration_bounds = array<i64: 1>, scalar_prefetch = 0 : i64, scratch_operands = 0 : i64, tpu.core_type = #tpu.core_type<tc>, window_params = [{transform_indices = @transform_0, window_bounds = array<i64: 1, 128>}, {transform_indices = @transform_1, window_bounds = array<i64: 1, 128>}, {transform_indices = @transform_2, window_bounds = array<i64: 1, 128>}, {transform_indices = @transform_3, window_bounds = array<i64: 1, 128>}]} {
    %c0 = arith.constant 0 : index
    %c0_0 = arith.constant 0 : index
    %0 = vector.load %arg1[%c0, %c0_0] : memref<1x128xf32, #tpu.memory_space<vmem>>, vector<1x128xf32>
    %c0_1 = arith.constant 0 : index
    %c0_2 = arith.constant 0 : index
    %1 = vector.load %arg2[%c0_1, %c0_2] : memref<1x128xf32, #tpu.memory_space<vmem>>, vector<1x128xf32>
    %c0_3 = arith.constant 0 : index
    %c0_4 = arith.constant 0 : index
    %2 = vector.load %arg3[%c0_3, %c0_4] : memref<1x128xf32, #tpu.memory_space<vmem>>, vector<1x128xf32>
    %cst = arith.constant 9.900000e-01 : f32
    %3 = vector.broadcast %cst : f32 to vector<1x128xf32>
    %4 = arith.mulf %3, %2 : vector<1x128xf32>
    %5 = arith.addf %0, %4 : vector<1x128xf32>
    %6 = arith.subf %5, %1 : vector<1x128xf32>
    %7 = arith.mulf %6, %6 : vector<1x128xf32>
    %c0_5 = arith.constant 0 : index
    %c0_6 = arith.constant 0 : index
    %8 = vector.load %arg4[%c0_5, %c0_6] : memref<1x128xf32, #tpu.memory_space<vmem>>, vector<1x128xf32>
    tpu.vector_store %arg4[%c0_5, %c0_6], %7 {strides = array<i32>} : memref<1x128xf32, #tpu.memory_space<vmem>>, vector<1x128xf32>,
    return
  }
  func.func @transform_0(%arg0: i32) -> (i32, i32) {
    %c0_i32 = arith.constant 0 : i32
    %c0_i32_0 = arith.constant 0 : i32
    return %arg0, %c0_i32 : i32, i32
  }
  func.func @transform_1(%arg0: i32) -> (i32, i32) {
    %c0_i32 = arith.constant 0 : i32
    %c0_i32_0 = arith.constant 0 : i32
    return %arg0, %c0_i32 : i32, i32
  }
  func.func @transform_2(%arg0: i32) -> (i32, i32) {
    %c0_i32 = arith.constant 0 : i32
    %c0_i32_0 = arith.constant 0 : i32
    return %arg0, %c0_i32 : i32, i32
  }
  func.func @transform_3(%arg0: i32) -> (i32, i32) {
    %c0_i32 = arith.constant 0 : i32
    %c0_i32_0 = arith.constant 0 : i32
    return %arg0, %c0_i32 : i32, i32
  }
}

</mosaic_0001>

<llo_original>
// kernel: tpu_custom_call.1
$region0: #{tpu_custom_call.1}
  #allocation0 [shape = 'u32[]', space=smem, size = 0x4, offset = 0x4, fixed_abs, tag = 'smem constant byte address 0x4 - core index']
  #allocation1 [shape = 'u32[144,128]{1,0:T(1,128)}', space=vmem, size = 0x12000, scoped, tag = 'internal scratch']
  %s0 = inlined_call_operand.hbm [shape: f32[1,128], index: 0, kind: input, shape index: {}]
  %s1 = inlined_call_operand.vmem [shape: f32[1,128], index: 1, kind: input, shape index: {}]
  %s2 = inlined_call_operand.vmem [shape: f32[1,128], index: 2, kind: input, shape index: {}]
  %s3 = inlined_call_operand.hbm [shape: f32[1,128], index: 3, kind: output, shape index: {}]
  %s4 = sld [smem:[#allocation0]]
  $region26: #{tpu_custom_call.1} parent=0
    _
  %s6 = ssub.s32 1, %s4
  %s7 = scalar_select 0, %s6, %s4
  $region1: #{tpu_custom_call.1} parent=0
    #allocation2 [shape = 'u8[512]{0}', space=vmem, size = 0x400, scoped, tag = 'input window, operand 0, single buffered']
    #allocation3 [shape = 's32[1]{0}', space=sflag, size = 0x4, scoped, tag = 'scoped memory for tpu_custom_call.1']
    #allocation4 [shape = 's32[1]{0}', space=sflag, size = 0x4, scoped, tag = 'scoped memory for tpu_custom_call.1']
    #allocation5 [shape = 'u8[512]{0}', space=vmem, size = 0x400, scoped, tag = 'output window, operand 0, single buffered']
    %8 = vsyncpa [#allocation3], 0
    %9 = vsyncpa [#allocation4], 0
    // Predicated region
    $region2: #{tpu_custom_call.1} parent=1 // pred_check
      _
    $region3: #{tpu_custom_call.1} parent=1 // pred_check_branch
      %11 = sbr.rel (0) target = $region5
    $region4: #{tpu_custom_call.1} parent=1 // pred_region
      %s13 = ssub.s32 16, 16
      %14 = vsyncadd [#allocation3], %s13
      %s16 = sshll.u32 [#allocation2], 4
      %s17 = int_to_ptr.vmem [resolvable:$true] %s16
      %19 = dma.hbm_to_vmem [thread:$0]  %s0, 16, %s17, [#allocation3]
    $region5: #{tpu_custom_call.1} parent=1 // pred_fallthru
      _
    // Predicated region
    $region6: #{tpu_custom_call.1} parent=1 // pred_check
      _
    $region7: #{tpu_custom_call.1} parent=1 // pred_check_branch
      %21 = sbr.rel (0) target = $region9
    $region8: #{tpu_custom_call.1} parent=1 // pred_region
      _
    $region9: #{tpu_custom_call.1} parent=1 // pred_fallthru
      _
    // Predicated region
    $region10: #{tpu_custom_call.1} parent=1 // pred_check
      _
    $region11: #{tpu_custom_call.1} parent=1 // pred_check_branch
      %23 = sbr.rel (0) target = $region13
    $region12: #{tpu_custom_call.1} parent=1 // pred_region
      _
    $region13: #{tpu_custom_call.1} parent=1 // pred_fallthru
      _
    // Predicated region
    $region14: #{tpu_custom_call.1} parent=1 // pred_check
      _
    $region15: #{tpu_custom_call.1} parent=1 // pred_check_branch
      %25 = sbr.rel (0) target = $region17
    $region16: #{tpu_custom_call.1} parent=1 // pred_region
      %26 = dma.done [#allocation3], 16
    $region17: #{tpu_custom_call.1} parent=1 // pred_fallthru
      _
    %v27 = vld [vmem:[#allocation2] sm:$0x1]
    %v28 = vld [vmem:[%s1] sm:$0x1]
    %v29 = vld [vmem:[%s2] sm:$0x1]
    %v30 = vmul.f32 %v29, 0.99
    %v31 = vadd.f32 %v27, %v30
    %v32 = vsub.f32 %v31, %v28
    %v33 = vmul.f32 %v32, %v32
    %34 = vst [vmem:[#allocation5] sm:$0x1] %v33
    // Predicated region
    $region18: #{tpu_custom_call.1} parent=1 // pred_check
      _
    $region19: #{tpu_custom_call.1} parent=1 // pred_check_branch
      %36 = sbr.rel (0) target = $region21
    $region20: #{tpu_custom_call.1} parent=1 // pred_region
      %s38 = ssub.s32 16, 16
      %39 = vsyncadd [#allocation4], %s38
      %s41 = sshll.u32 [#allocation5], 4
      %s42 = int_to_ptr.vmem [resolvable:$true] %s41
      %44 = dma.vmem_to_hbm [thread:$0]  %s42, 16, %s3, [#allocation4]
    $region21: #{tpu_custom_call.1} parent=1 // pred_fallthru
      _
    // Predicated region
    $region22: #{tpu_custom_call.1} parent=1 // pred_check
      _
    $region23: #{tpu_custom_call.1} parent=1 // pred_check_branch
      %46 = sbr.rel (0) target = $region25
    $region24: #{tpu_custom_call.1} parent=1 // pred_region
      %47 = dma.done [#allocation4], 16
    $region25: #{tpu_custom_call.1} parent=1 // pred_fallthru
      _
    %48 = vsyncpa [#allocation3], 1
    %49 = vsyncpa [#allocation4], 1

</llo_original>
